<compile_context>
chip_gen: v5e
topology: v5e:2x2
jax: 0.10.0
libtpu: 0.0.40
codegen_flags: <defaults>
</compile_context>

<pallas_src>
import functools

import jax
import jax.numpy as jnp
import numpy as np
from jax.experimental import pallas as pl
from jax.experimental.pallas import tpu as pltpu


def _mlp_channel_kernel(x_ref, w1_ref, b1_ref, w2_ref, b2_ref, o_ref, *, inv_s):
    # x_ref: (Bt, C, S) in the input's native dtype.
    x = x_ref[...]

    # AdaptiveAvgPool2d(1): accumulate in f32 (cast fused into the reduce) and
    # fold 1/S as a compile-time constant instead of a per-step divide.
    avg = jnp.sum(x, axis=2, dtype=jnp.float32) * inv_s        # (Bt, C)

    # AdaptiveMaxPool2d(1): max is exact in the native dtype; only the tiny
    # (Bt, C) result gets cast to f32.
    mx = jnp.max(x, axis=2).astype(jnp.float32)                # (Bt, C)

    # mlp(cat([avg, max])) -- batched over the Bt fused batch rows.
    y = jnp.concatenate([avg, mx], axis=1)                     # (Bt, 2C)
    h = jnp.dot(y, w1_ref[...], preferred_element_type=jnp.float32) + b1_ref[...]
    h = jnp.maximum(h, 0.0)                                    # ReLU
    cw = jax.nn.sigmoid(
        jnp.dot(h, w2_ref[...], preferred_element_type=jnp.float32) + b2_ref[...]
    )                                                          # (Bt, C)

    # x + cw * x == x * (1 + cw); do the writeback multiply in x's native dtype
    # (for bf16 inputs this halves VPU/vreg traffic on v6e/v7x).
    scale = (1.0 + cw).astype(x_ref.dtype)[:, :, None]         # (Bt, C, 1)
    o_ref[...] = (x_ref[...] * scale).astype(o_ref.dtype)


def _vmem_budget():
    """(per-step tile target bytes, vmem_limit_bytes), generation aware."""
    try:
        vmem = pltpu.get_tpu_info().vmem_capacity_bytes
    except Exception:
        vmem = None
    if vmem is not None and vmem >= 96 * 1024 * 1024:
        # v5e / v6e: 128 MiB physical VMEM.
        return 8 * 1024 * 1024, 64 * 1024 * 1024
    # v7x (64 MiB physical VMEM) or unknown: stay conservative.
    return 4 * 1024 * 1024, 48 * 1024 * 1024


def _choose_batch_tile(B, C, S, itemsize, target_bytes):
    """Largest divisor of B whose (Bt, C, S) tile stays <= target_bytes, capped
    at B//2 (when possible) so the grid has >=2 steps for v7x's two cores."""
    divisors = [d for d in range(1, B + 1) if B % d == 0]
    fits = [d for d in divisors if d * C * S * itemsize <= target_bytes]
    if not fits:
        return 1
    best = max(fits)
    if best == B and B > 1:
        smaller = [d for d in fits if d <= B // 2]
        if smaller:
            best = max(smaller)
    return best


def mlp_channel_attention(x, w1, b1, w2, b2):
    """x: (B, C, T, V); w1: (2C, 2C) [in, out]; b1: (2C,); w2: (2C, C); b2: (C,)."""
    B, C, T, V = x.shape
    S = T * V

    # Free metadata reshape (row-major contiguous); no HBM copy.
    x3 = x.reshape(B, C, S)

    b1r = b1.reshape(1, 2 * C)
    b2r = b2.reshape(1, C)

    target_bytes, vmem_limit = _vmem_budget()
    Bt = _choose_batch_tile(B, C, S, x.dtype.itemsize, target_bytes)
    grid = (B // Bt,)

    kernel = functools.partial(_mlp_channel_kernel, inv_s=1.0 / float(S))

    out3 = pl.pallas_call(
        kernel,
        out_shape=jax.ShapeDtypeStruct((B, C, S), x.dtype),
        grid_spec=pltpu.PrefetchScalarGridSpec(
            num_scalar_prefetch=0,
            grid=grid,
            in_specs=[
                # Full C and S dims per block -> no (8,128) padding requirement,
                # Mosaic masks the lane tail on load/store.
                pl.BlockSpec((Bt, C, S), lambda i: (i, 0, 0)),
                # weights/biases: constant index_map -> fetched once, never re-DMA'd.
                pl.BlockSpec((2 * C, 2 * C), lambda i: (0, 0)),
                pl.BlockSpec((1, 2 * C), lambda i: (0, 0)),
                pl.BlockSpec((2 * C, C), lambda i: (0, 0)),
                pl.BlockSpec((1, C), lambda i: (0, 0)),
            ],
            out_specs=pl.BlockSpec((Bt, C, S), lambda i: (i, 0, 0)),
        ),
        compiler_params=pltpu.CompilerParams(
            dimension_semantics=("parallel",),
            vmem_limit_bytes=vmem_limit,
        ),
    )(x3, w1, b1r, w2, b2r)

    return out3.reshape(B, C, T, V)


def _reference(x, w1, b1, w2, b2):
    avg = jnp.mean(x.astype(jnp.float32), axis=(2, 3))
    mx = jnp.max(x, axis=(2, 3)).astype(jnp.float32)
    y = jnp.concatenate([avg, mx], axis=1)
    h = jnp.maximum(y @ w1.astype(jnp.float32) + b1, 0.0)
    cw = jax.nn.sigmoid(h @ w2.astype(jnp.float32) + b2)
    return x + cw.astype(x.dtype)[:, :, None, None] * x


def _run_case(key, B, C, T, V):
    k_x, k_w1, k_b1, k_w2, k_b2 = jax.random.split(key, 5)
    x = jax.random.normal(k_x, (B, C, T, V), dtype=jnp.float32)
    # Linear weights stored as [in, out].
    w1 = jax.random.normal(k_w1, (2 * C, 2 * C), dtype=jnp.float32) * 0.1
    b1 = jax.random.normal(k_b1, (2 * C,), dtype=jnp.float32) * 0.1
    w2 = jax.random.normal(k_w2, (2 * C, C), dtype=jnp.float32) * 0.1
    b2 = jax.random.normal(k_b2, (C,), dtype=jnp.float32) * 0.1

    out = jax.block_until_ready(mlp_channel_attention(x, w1, b1, w2, b2))
    ref = jax.block_until_ready(_reference(x, w1, b1, w2, b2))
    np.testing.assert_allclose(np.asarray(out), np.asarray(ref), rtol=1e-5, atol=1e-5)


if __name__ == "__main__":
    key = jax.random.PRNGKey(0)
    k0, k1 = jax.random.split(key)

    # Primary small case (S = 128, lane-aligned).
    _run_case(k0, B=2, C=4, T=8, V=16)
    # ResNet-style spatial size that is NOT a multiple of 128 (exercises the
    # unpadded / masked-lane-tail path).
    _run_case(k1, B=2, C=4, T=7, V=7)

    print("KERNEL_OK")
</pallas_src>

<mosaic_0001>
module attributes {stable_mosaic.version = 11 : i64} {
  func.func @_mlp_channel_kernel(%arg0: i32, %arg1: memref<1x4x128xf32, #tpu.memory_space<vmem>>, %arg2: memref<8x8xf32, #tpu.memory_space<vmem>>, %arg3: memref<1x8xf32, #tpu.memory_space<vmem>>, %arg4: memref<8x4xf32, #tpu.memory_space<vmem>>, %arg5: memref<1x4xf32, #tpu.memory_space<vmem>>, %arg6: memref<1x4x128xf32, #tpu.memory_space<vmem>>) attributes {dimension_semantics = [#tpu.dimension_semantics<parallel>], iteration_bounds = array<i64: 2>, scalar_prefetch = 0 : i64, scratch_operands = 0 : i64, tpu.core_type = #tpu.core_type<tc>, window_params = [{transform_indices = @transform_0, window_bounds = array<i64: 1, 4, 128>}, {pipeline_mode = #tpu.pipeline_mode<synchronous>, transform_indices = @transform_1, window_bounds = array<i64: 8, 8>}, {pipeline_mode = #tpu.pipeline_mode<synchronous>, transform_indices = @transform_2, window_bounds = array<i64: 1, 8>}, {pipeline_mode = #tpu.pipeline_mode<synchronous>, transform_indices = @transform_3, window_bounds = array<i64: 8, 4>}, {pipeline_mode = #tpu.pipeline_mode<synchronous>, transform_indices = @transform_4, window_bounds = array<i64: 1, 4>}, {transform_indices = @transform_5, window_bounds = array<i64: 1, 4, 128>}]} {
    %c0 = arith.constant 0 : index
    %c0_0 = arith.constant 0 : index
    %c0_1 = arith.constant 0 : index
    %0 = vector.load %arg1[%c0, %c0_0, %c0_1] : memref<1x4x128xf32, #tpu.memory_space<vmem>>, vector<1x4x128xf32>
    %cst = arith.constant dense<0.000000e+00> : vector<1x4xf32>
    %1 = vector.multi_reduction <add>, %0, %cst [2] : vector<1x4x128xf32> to vector<1x4xf32>
    %cst_2 = arith.constant 7.812500e-03 : f32
    %2 = vector.broadcast %cst_2 : f32 to vector<1x4xf32>
    %3 = arith.mulf %1, %2 : vector<1x4xf32>
    %cst_3 = arith.constant dense<0xFF800000> : vector<1x4xf32>
    %4 = vector.multi_reduction <maximumf>, %0, %cst_3 [2] : vector<1x4x128xf32> to vector<1x4xf32>
    %5 = tpu.concatenate %3, %4 in 1 : vector<1x4xf32>, vector<1x4xf32> -> vector<1x8xf32>
    %c0_4 = arith.constant 0 : index
    %c0_5 = arith.constant 0 : index
    %6 = vector.load %arg2[%c0_4, %c0_5] : memref<8x8xf32, #tpu.memory_space<vmem>>, vector<8x8xf32>
    %cst_6 = arith.constant dense<0.000000e+00> : vector<1x8xf32>
    %7 = tpu.matmul %5, %6, %cst_6 {dimension_numbers = #tpu.dot_dimension_numbers<[1], [0], [0], [1], [0, 0, 1, 1], [], []>} : vector<1x8xf32>, vector<8x8xf32>, vector<1x8xf32> -> vector<1x8xf32>
    %c0_7 = arith.constant 0 : index
    %c0_8 = arith.constant 0 : index
    %8 = vector.load %arg3[%c0_7, %c0_8] : memref<1x8xf32, #tpu.memory_space<vmem>>, vector<1x8xf32>
    %9 = arith.addf %7, %8 : vector<1x8xf32>
    %cst_9 = arith.constant 0.000000e+00 : f32
    %10 = vector.broadcast %cst_9 : f32 to vector<1x8xf32>
    %11 = arith.maximumf %9, %10 : vector<1x8xf32>
    %c0_10 = arith.constant 0 : index
    %c0_11 = arith.constant 0 : index
    %12 = vector.load %arg4[%c0_10, %c0_11] : memref<8x4xf32, #tpu.memory_space<vmem>>, vector<8x4xf32>
    %cst_12 = arith.constant dense<0.000000e+00> : vector<1x4xf32>
    %13 = tpu.matmul %11, %12, %cst_12 {dimension_numbers = #tpu.dot_dimension_numbers<[1], [0], [0], [1], [0, 0, 1, 1], [], []>} : vector<1x8xf32>, vector<8x4xf32>, vector<1x4xf32> -> vector<1x4xf32>
    %c0_13 = arith.constant 0 : index
    %c0_14 = arith.constant 0 : index
    %14 = vector.load %arg5[%c0_13, %c0_14] : memref<1x4xf32, #tpu.memory_space<vmem>>, vector<1x4xf32>
    %15 = arith.addf %13, %14 : vector<1x4xf32>
    %16 = arith.negf %15 : vector<1x4xf32>
    %17 = math.exp %16 : vector<1x4xf32>
    %cst_15 = arith.constant 1.000000e+00 : f32
    %18 = vector.broadcast %cst_15 : f32 to vector<1x4xf32>
    %19 = arith.addf %18, %17 : vector<1x4xf32>
    %20 = arith.divf %18, %19 : vector<1x4xf32>
    %cst_16 = arith.constant 1.000000e+00 : f32
    %21 = vector.broadcast %cst_16 : f32 to vector<1x4xf32>
    %22 = arith.addf %21, %20 : vector<1x4xf32>
    %23 = vector.shape_cast %22 : vector<1x4xf32> to vector<1x4x1xf32>
    %c0_17 = arith.constant 0 : index
    %c0_18 = arith.constant 0 : index
    %c0_19 = arith.constant 0 : index
    %24 = vector.load %arg1[%c0_17, %c0_18, %c0_19] : memref<1x4x128xf32, #tpu.memory_space<vmem>>, vector<1x4x128xf32>
    %25 = vector.broadcast %23 : vector<1x4x1xf32> to vector<1x4x128xf32>
    %26 = arith.mulf %24, %25 : vector<1x4x128xf32>
    %c0_20 = arith.constant 0 : index
    %c0_21 = arith.constant 0 : index
    %c0_22 = arith.constant 0 : index
    %27 = vector.load %arg6[%c0_20, %c0_21, %c0_22] : memref<1x4x128xf32, #tpu.memory_space<vmem>>, vector<1x4x128xf32>
    tpu.vector_store %arg6[%c0_20, %c0_21, %c0_22], %26 {strides = array<i32>} : memref<1x4x128xf32, #tpu.memory_space<vmem>>, vector<1x4x128xf32>,
    return
  }
  func.func @transform_0(%arg0: i32) -> (i32, i32, i32) {
    %c0_i32 = arith.constant 0 : i32
    %c0_i32_0 = arith.constant 0 : i32
    %c0_i32_1 = arith.constant 0 : i32
    return %arg0, %c0_i32, %c0_i32_0 : i32, i32, i32
  }
  func.func @transform_1(%arg0: i32) -> (i32, i32) {
    %c0_i32 = arith.constant 0 : i32
    %c0_i32_0 = arith.constant 0 : i32
    %c0_i32_1 = arith.constant 0 : i32
    return %c0_i32, %c0_i32_0 : i32, i32
  }
  func.func @transform_2(%arg0: i32) -> (i32, i32) {
    %c0_i32 = arith.constant 0 : i32
    %c0_i32_0 = arith.constant 0 : i32
    %c0_i32_1 = arith.constant 0 : i32
    return %c0_i32, %c0_i32_0 : i32, i32
  }
  func.func @transform_3(%arg0: i32) -> (i32, i32) {
    %c0_i32 = arith.constant 0 : i32
    %c0_i32_0 = arith.constant 0 : i32
    %c0_i32_1 = arith.constant 0 : i32
    return %c0_i32, %c0_i32_0 : i32, i32
  }
  func.func @transform_4(%arg0: i32) -> (i32, i32) {
    %c0_i32 = arith.constant 0 : i32
    %c0_i32_0 = arith.constant 0 : i32
    %c0_i32_1 = arith.constant 0 : i32
    return %c0_i32, %c0_i32_0 : i32, i32
  }
  func.func @transform_5(%arg0: i32) -> (i32, i32, i32) {
    %c0_i32 = arith.constant 0 : i32
    %c0_i32_0 = arith.constant 0 : i32
    %c0_i32_1 = arith.constant 0 : i32
    return %arg0, %c0_i32, %c0_i32_0 : i32, i32, i32
  }
}

</mosaic_0001>

<llo_original>
// kernel: tpu_custom_call.1
$region0: #{tpu_custom_call.1}
  #allocation0 [shape = 'u32[]', space=smem, size = 0x4, offset = 0x4, fixed_abs, tag = 'smem constant byte address 0x4 - core index']
  #allocation1 [shape = 'u32[72,128]{1,0:T(1,128)}', space=vmem, size = 0x9000, scoped, tag = 'internal scratch']
  %s0 = inlined_call_operand.vmem [shape: f32[2,4,128], index: 0, kind: input, shape index: {}]
  %s1 = inlined_call_operand.hbm [shape: f32[8,8], index: 1, kind: input, shape index: {}]
  %s2 = inlined_call_operand.vmem [shape: f32[1,8], index: 2, kind: input, shape index: {}]
  %s3 = inlined_call_operand.vmem [shape: f32[8,4], index: 3, kind: input, shape index: {}]
  %s4 = inlined_call_operand.vmem [shape: f32[1,4], index: 4, kind: input, shape index: {}]
  %s5 = inlined_call_operand.hbm [shape: f32[2,4,128], index: 5, kind: output, shape index: {}]
  %s6 = sld [smem:[#allocation0]]
  $region57: #{tpu_custom_call.1} parent=0
    _
  %s8 = ssub.s32 1, %s6
  %s9 = scalar_select 0, %s8, %s6
  $region1: #{tpu_custom_call.1} parent=0
    #allocation2 [shape = 'u8[4096]{0}', space=vmem, size = 0x1000, scoped, tag = 'input window, operand 1, single buffered']
    #allocation3 [shape = 's32[2]{0}', space=sflag, size = 0x8, scoped, tag = 'scoped memory for tpu_custom_call.1']
    #allocation4 [shape = 's32[2]{0}', space=sflag, size = 0x8, scoped, tag = 'scoped memory for tpu_custom_call.1']
    #allocation5 [shape = 'u8[4096]{0}', space=vmem, size = 0x1000, scoped, tag = 'output window, operand 0']
    %10 = vsyncpa [#allocation3], 0
    %11 = vsyncpa [#allocation4], 0
    %s12 = scalar_lea.sflag [#allocation4], 1
    %13 = vsyncpa %s12, 0
    loop: start=0, step=1, limit=4
    $region2: #{tpu_custom_call.1} parent=1 // loop_pre_header
      _
    $region3: #{tpu_custom_call.1} parent=1 // loop_header
      %s15 = sphi 0, %s19
      %p16 = scmp.ge.s32.totalorder %s15, 4
      %s25 = sphi 0, %s27
      %s28 = sphi 0, %s25
      %s29 = sphi 0, %s28
      %s45 = sphi 0, %s29
      %s49 = sphi 0, %s49
      %s51 = sphi 0, %s49
      %s52 = sphi 0, %s51
      %s66 = sphi 0, %s52
      %s70 = sphi 0, %s70
      %s72 = sphi 0, %s70
      %s73 = sphi 0, %s72
      %s87 = sphi 0, %s73
      %s91 = sphi 0, %s91
      %s93 = sphi 0, %s91
      %s94 = sphi 0, %s93
      %s108 = sphi 0, %s94
      %s112 = sphi 0, %s112
      %s114 = sphi 0, %s112
      %s115 = sphi 0, %s114
      %s129 = sphi 0, %s115
      %s135 = sphi 0, %s137
      %s138 = sphi 0, %s135
      %s139 = sphi 0, %s138
      %s155 = sphi 0, %s139
    $region4: #{tpu_custom_call.1} parent=1 // loop_header_branch
      %18 = sbr.rel (%p16) target = $region8
    $region5: #{tpu_custom_call.1} parent=1 // loop_body
      %s20 = ssub.s32 %s15, 1
      %s21 = ssub.s32 %s15, 2
      %s22 = sadd.s32 %s15, 1
      %s23 = ssub.s32 %s15, %s22
      %p24 = scmp.eq.s32.totalorder %s23, 0
      %s26 = sadd.s32 %s25, 1
      %s27 = scalar_select %p24, %s25, %s26
      %p30 = pneg %p24
      %p31 = scmp.eq.s32.totalorder %s15, 1
      %p32 = por %p30, %p31
      %p33 = scmp.ne.s32.totalorder %s25, %s28
      %p34 = scmp.eq.s32.totalorder %s15, 0
      %p35 = por %p33, %p34
      %p36 = scmp.ne.s32.totalorder %s25, %s28
      %p37 = scmp.eq.s32.totalorder %s20, 1
      %p38 = por %p36, %p37
      %p39 = scmp.ne.s32.totalorder %s28, %s29
      %p40 = scmp.eq.s32.totalorder %s20, 0
      %p41 = por %p39, %p40
      %p42 = scmp.ne.s32.totalorder %s28, %s29
      %p43 = scmp.eq.s32.totalorder %s21, 1
      %p44 = por %p42, %p43
      %p46 = scmp.ne.s32.totalorder %s29, %s45
      %p47 = scmp.eq.s32.totalorder %s21, 0
      %p48 = por %p46, %p47
      %s50 = sadd.s32 %s49, 1
      %p53 = scmp.eq.s32.totalorder %s15, 1
      %p54 = scmp.ne.s32.totalorder %s49, %s51
      %p55 = scmp.eq.s32.totalorder %s15, 0
      %p56 = por %p54, %p55
      %p57 = scmp.ne.s32.totalorder %s49, %s51
      %p58 = scmp.eq.s32.totalorder %s20, 1
      %p59 = por %p57, %p58
      %p60 = scmp.ne.s32.totalorder %s51, %s52
      %p61 = scmp.eq.s32.totalorder %s20, 0
      %p62 = por %p60, %p61
      %p63 = scmp.ne.s32.totalorder %s51, %s52
      %p64 = scmp.eq.s32.totalorder %s21, 1
      %p65 = por %p63, %p64
      %p67 = scmp.ne.s32.totalorder %s52, %s66
      %p68 = scmp.eq.s32.totalorder %s21, 0
      %p69 = por %p67, %p68
      %s71 = sadd.s32 %s70, 1
      %p74 = scmp.eq.s32.totalorder %s15, 1
      %p75 = scmp.ne.s32.totalorder %s70, %s72
      %p76 = scmp.eq.s32.totalorder %s15, 0
      %p77 = por %p75, %p76
      %p78 = scmp.ne.s32.totalorder %s70, %s72
      %p79 = scmp.eq.s32.totalorder %s20, 1
      %p80 = por %p78, %p79
      %p81 = scmp.ne.s32.totalorder %s72, %s73
      %p82 = scmp.eq.s32.totalorder %s20, 0
      %p83 = por %p81, %p82
      %p84 = scmp.ne.s32.totalorder %s72, %s73
      %p85 = scmp.eq.s32.totalorder %s21, 1
      %p86 = por %p84, %p85
      %p88 = scmp.ne.s32.totalorder %s73, %s87
      %p89 = scmp.eq.s32.totalorder %s21, 0
      %p90 = por %p88, %p89
      %s92 = sadd.s32 %s91, 1
      %p95 = scmp.eq.s32.totalorder %s15, 1
      %p96 = scmp.ne.s32.totalorder %s91, %s93
      %p97 = scmp.eq.s32.totalorder %s15, 0
      %p98 = por %p96, %p97
      %p99 = scmp.ne.s32.totalorder %s91, %s93
      %p100 = scmp.eq.s32.totalorder %s20, 1
      %p101 = por %p99, %p100
      %p102 = scmp.ne.s32.totalorder %s93, %s94
      %p103 = scmp.eq.s32.totalorder %s20, 0
      %p104 = por %p102, %p103
      %p105 = scmp.ne.s32.totalorder %s93, %s94
      %p106 = scmp.eq.s32.totalorder %s21, 1
      %p107 = por %p105, %p106
      %p109 = scmp.ne.s32.totalorder %s94, %s108
      %p110 = scmp.eq.s32.totalorder %s21, 0
      %p111 = por %p109, %p110
      %s113 = sadd.s32 %s112, 1
      %p116 = scmp.eq.s32.totalorder %s15, 1
      %p117 = scmp.ne.s32.totalorder %s112, %s114
      %p118 = scmp.eq.s32.totalorder %s15, 0
      %p119 = por %p117, %p118
      %p120 = scmp.ne.s32.totalorder %s112, %s114
      %p121 = scmp.eq.s32.totalorder %s20, 1
      %p122 = por %p120, %p121
      %p123 = scmp.ne.s32.totalorder %s114, %s115
      %p124 = scmp.eq.s32.totalorder %s20, 0
      %p125 = por %p123, %p124
      %p126 = scmp.ne.s32.totalorder %s114, %s115
      %p127 = scmp.eq.s32.totalorder %s21, 1
      %p128 = por %p126, %p127
      %p130 = scmp.ne.s32.totalorder %s115, %s129
      %p131 = scmp.eq.s32.totalorder %s21, 0
      %p132 = por %p130, %p131
      %s133 = ssub.s32 %s15, %s22
      %p134 = scmp.eq.s32.totalorder %s133, 0
      %s136 = sadd.s32 %s135, 1
      %s137 = scalar_select %p134, %s135, %s136
      %p140 = pneg %p134
      %p141 = scmp.eq.s32.totalorder %s15, 1
      %p142 = por %p140, %p141
      %p143 = scmp.ne.s32.totalorder %s135, %s138
      %p144 = scmp.eq.s32.totalorder %s15, 0
      %p145 = por %p143, %p144
      %p146 = scmp.ne.s32.totalorder %s135, %s138
      %p147 = scmp.eq.s32.totalorder %s20, 1
      %p148 = por %p146, %p147
      %p149 = scmp.ne.s32.totalorder %s138, %s139
      %p150 = scmp.eq.s32.totalorder %s20, 0
      %p151 = por %p149, %p150
      %p152 = scmp.ne.s32.totalorder %s138, %s139
      %p153 = scmp.eq.s32.totalorder %s21, 1
      %p154 = por %p152, %p153
      %p156 = scmp.ne.s32.totalorder %s139, %s155
      %p157 = scmp.eq.s32.totalorder %s21, 0
      %p158 = por %p156, %p157
      %p159 = scmp.le.s32.totalorder 1, %s15
      %p160 = scmp.lt.s32.totalorder %s15, 3
      %p161 = pnand %p159, %p160
      %p162 = pneg %p161
      // Predicated region
      $region9: #{tpu_custom_call.1} parent=5 // pred_check
        _
      $region10: #{tpu_custom_call.1} parent=5 // pred_check_branch
        %164 = sbr.rel (%p161) target = $region12
      $region11: #{tpu_custom_call.1} parent=5 // pred_region
        %s165 = ssub.s32 %s15, 1
        // Predicated region
        $region13: #{tpu_custom_call.1} parent=11 // pred_check
          %p166 = pneg %p62
        $region14: #{tpu_custom_call.1} parent=11 // pred_check_branch
          %168 = sbr.rel (%p166) target = $region16
        $region15: #{tpu_custom_call.1} parent=11 // pred_region
          %170 = vsyncadd [#allocation3], 0
          %s172 = sshll.u32 %s1, 4
          %s173 = int_to_ptr.hbm [resolvable:$true] %s172
          %s174 = sshll.u32 [#allocation2], 4
          %s175 = int_to_ptr.vmem [resolvable:$true] %s174
          %177 = dma.hbm_to_vmem [thread:$0]  %s173, 128, %s175, [#allocation3]
        $region16: #{tpu_custom_call.1} parent=11 // pred_fallthru
          _
        // Predicated region
        $region17: #{tpu_custom_call.1} parent=11 // pred_check
          %p178 = pneg %p83
        $region18: #{tpu_custom_call.1} parent=11 // pred_check_branch
          %180 = sbr.rel (%p178) target = $region20
        $region19: #{tpu_custom_call.1} parent=11 // pred_region
          _
        $region20: #{tpu_custom_call.1} parent=11 // pred_fallthru
          _
        // Predicated region
        $region21: #{tpu_custom_call.1} parent=11 // pred_check
          %p181 = pneg %p104
        $region22: #{tpu_custom_call.1} parent=11 // pred_check_branch
          %183 = sbr.rel (%p181) target = $region24
        $region23: #{tpu_custom_call.1} parent=11 // pred_region
          _
        $region24: #{tpu_custom_call.1} parent=11 // pred_fallthru
          _
        // Predicated region
        $region25: #{tpu_custom_call.1} parent=11 // pred_check
          %p184 = pneg %p125
        $region26: #{tpu_custom_call.1} parent=11 // pred_check_branch
          %186 = sbr.rel (%p184) target = $region28
        $region27: #{tpu_custom_call.1} parent=11 // pred_region
          _
        $region28: #{tpu_custom_call.1} parent=11 // pred_fallthru
          _
      $region12: #{tpu_custom_call.1} parent=5 // pred_fallthru
        _
      %p187 = scmp.lt.s32.totalorder %s15, 2
      // Predicated region
      $region29: #{tpu_custom_call.1} parent=5 // pred_check
        %p188 = pneg %p187
      $region30: #{tpu_custom_call.1} parent=5 // pred_check_branch
        %190 = sbr.rel (%p188) target = $region32
      $region31: #{tpu_custom_call.1} parent=5 // pred_region
        // Predicated region
        $region33: #{tpu_custom_call.1} parent=31 // pred_check
          %p191 = pneg %p35
        $region34: #{tpu_custom_call.1} parent=31 // pred_check_branch
          %193 = sbr.rel (%p191) target = $region36
        $region35: #{tpu_custom_call.1} parent=31 // pred_region
          %p194 = scmp.lt.s32.totalorder %s15, 1
          %s195 = scalar_select %p194, %s15, 1
          %s196 = smul.addr %s195, 4
          %s197 = scalar_lea.vmem %s0, %s196
        $region36: #{tpu_custom_call.1} parent=31 // pred_fallthru
          _
      $region32: #{tpu_custom_call.1} parent=5 // pred_fallthru
        _
      %p198 = scmp.le.s32.totalorder 1, %s15
      %p199 = scmp.lt.s32.totalorder %s15, 3
      %p200 = pnand %p198, %p199
      %p201 = pneg %p200
      // Predicated region
      $region37: #{tpu_custom_call.1} parent=5 // pred_check
        _
      $region38: #{tpu_custom_call.1} parent=5 // pred_check_branch
        %203 = sbr.rel (%p200) target = $region40
      $region39: #{tpu_custom_call.1} parent=5 // pred_region
        %s204 = ssub.s32 %s15, 1
        // Predicated region
        $region41: #{tpu_custom_call.1} parent=39 // pred_check
          %p205 = pneg %p62
        $region42: #{tpu_custom_call.1} parent=39 // pred_check_branch
          %207 = sbr.rel (%p205) target = $region44
        $region43: #{tpu_custom_call.1} parent=39 // pred_region
          %209 = dma.done [#allocation3], 128
        $region44: #{tpu_custom_call.1} parent=39 // pred_fallthru
          _
        %p210 = scmp.lt.s32.totalorder %s20, 1
        %s211 = scalar_select %p210, %s20, 1
        %s212 = smul.addr %s211, 4
        %s213 = scalar_lea.vmem %s0, %s212
        %p214 = pneg %p41
        %p215 = pneg %p38
        %p216 = pneg %p62
        %p217 = pneg %p59
        %p218 = pneg %p83
        %p219 = pneg %p80
        %p220 = pneg %p104
        %p221 = pneg %p101
        %p222 = pneg %p125
        %p223 = pneg %p122
        %p224 = pneg %p151
        %p225 = pneg %p148
        %s226 = sand.u32 %s138, 1
        %s227 = scalar_lea.sflag [#allocation4], %s226
        %s228 = sand.u32 %s138, 1
        %s229 = smul.addr %s228, 4
        %s230 = scalar_lea.vmem [#allocation5], %s229
        %p231 = scmp.lt.s32.totalorder %s20, 1
        %s232 = scalar_select %p231, %s20, 1
        %s233 = smul.addr %s232, 4
        %s234 = scalar_lea.vmem %s0, %s233
        %v235 = vld [vmem:[%s234] sm:$0xf]
        %vm236 = vcmask 1043456
        %v237 = vsel %vm236, %v235, 0.0
        %238 = vadd.xlane.f32.xlu0 %v237
        %v239 = vpop.xlane.xlu0 %238
        %v240 = vmul.f32 %v239, 0.0078125
        %v241 = vsel %vm236, %v235, -inf
        %242 = vmax.xlane.f32.xlu0 %v241
        %v243 = vpop.xlane.xlu0 %242
        %v245 = vlaneseq
        %v246 = vand.u32 %v245, 127
        %v247 = vperm.slane %v240, %v246
        %v250 = vadd.s32 %v246, 4294967292
        %v251 = vperm.slane %v243, %v250
        %vm253 = vcmask 31744
        %v254 = vsel %vm253, %v247, %v251
        %v255 = vld [vmem:[#allocation2] sm:$0xff]
        %v256 = vld [vmem:[%s2] sm:$0x1]
        %vm257 = vcmask 64512
        %v259 = vsel %vm257, %v254, 0
        %261 = vmatpush.msra.mxu0 0.0
        %262 = vmatpush.msra.mxu0 0.0
        %263 = vmatpush.msra.mxu0 0.0
        %264 = vmatpush.msra.mxu0 0.0
        %265 = vmatpush.msra.mxu0 0.0
        %266 = vmatpush.msra.mxu0 0.0
        %267 = vmatpush.msra.mxu0 0.0
        %268 = vmatpush.msra.mxu0 0.0
        %269 = vmatpush.msra.mxu0 0.0
        %270 = vmatpush.msra.mxu0 0.0
        %271 = vmatpush.msra.mxu0 0.0
        %272 = vmatpush.msra.mxu0 0.0
        %273 = vmatpush.msra.mxu0 0.0
        %274 = vmatpush.msra.mxu0 0.0
        %275 = vmatpush.msra.mxu0 0.0
        %276 = vmatpush.msra.mxu0 %v255
        %277 = vmatmul.f32.gmra.mxu0 %v259
        %v278 = vpop.f32.mrf.mxu0
        %v279 = vadd.f32 %v256, %v278
        %280 = vdwg.mxu0
        %v281 = vmax.f32 %v279, 0.0
        %v282 = vld [vmem:[%s3] sm:$0xff]
        %v283 = vld [vmem:[%s4] sm:$0x1]
        %v285 = vsel %vm257, %v281, 0
        %287 = vmatpush.msra.mxu0 0.0
        %288 = vmatpush.msra.mxu0 0.0
        %289 = vmatpush.msra.mxu0 0.0
        %290 = vmatpush.msra.mxu0 0.0
        %291 = vmatpush.msra.mxu0 0.0
        %292 = vmatpush.msra.mxu0 0.0
        %293 = vmatpush.msra.mxu0 0.0
        %294 = vmatpush.msra.mxu0 0.0
        %295 = vmatpush.msra.mxu0 0.0
        %296 = vmatpush.msra.mxu0 0.0
        %297 = vmatpush.msra.mxu0 0.0
        %298 = vmatpush.msra.mxu0 0.0
        %299 = vmatpush.msra.mxu0 0.0
        %300 = vmatpush.msra.mxu0 0.0
        %301 = vmatpush.msra.mxu0 0.0
        %302 = vmatpush.msra.mxu0 %v282
        %303 = vmatmul.f32.gmra.mxu0 %v285
        %v304 = vpop.f32.mrf.mxu0
        %v305 = vadd.f32 %v283, %v304
        %306 = vdwg.mxu0
        %v307 = vxor.u32 %v305, 2147483648
        %v308 = vmul.f32 %v307, 1.442695
        %v309 = vpow.pop %v308
        %v310 = vadd.f32 %v309, 1.0
        %v311 = vrcp.pop %v310
        %v312 = vmul.f32 %v310, %v311
        %v313 = vsub.f32 1.0, %v312
        %v314 = vmul.f32 %v311, %v313
        %v315 = vadd.f32 %v311, %v314
        %vm316 = vweird.f32 %v310
        %vm317 = vweird.f32 %v311
        %vm318 = vmor %vm316, %vm317
        %v319 = vsel %vm318, %v311, %v315
        %v320 = vand.u32 2147483647, %v310
        %vm321 = vcmp.eq.f32.partialorder %v320, 8.507059e+37
        %v322 = vand.u32 %v310, 2147483648
        %v323 = vor.u32 1.1754944e-38, %v322
        %v324 = vsel %vm321, %v323, %v319
        %v325 = vmul.f32 1.0, %v324
        %v326 = vadd.f32 %v325, 1.0
        %v327 = vperm.slane %v326, 0
        %v328 = vlaneseq
        %v329 = vshrl.u32 %v328, 7
        %331 = vset.pattern.permute.xlu0 %v329
        %332 = vperm.xlu0 %331, %v327
        %v333 = vpop.permute.xlu0 %332
        %v334 = vmul.f32 %v235, %v333
        %335 = vst [vmem:[%s230] sm:$0xf] %v334
        %s336 = sand.u32 %s138, 1
        %s337 = scalar_lea.sflag [#allocation4], %s336
        %s338 = sand.u32 %s138, 1
        %s339 = smul.addr %s338, 4
        %s340 = scalar_lea.vmem [#allocation5], %s339
        // Predicated region
        $region45: #{tpu_custom_call.1} parent=39 // pred_check
          %p341 = pneg %p148
        $region46: #{tpu_custom_call.1} parent=39 // pred_check_branch
          %343 = sbr.rel (%p341) target = $region48
        $region47: #{tpu_custom_call.1} parent=39 // pred_region
          %345 = vsyncadd %s337, 0
          %s346 = smul.addr %s20, 4
          %s347 = scalar_lea.hbm %s5, %s346
          %s349 = sshll.u32 %s340, 4
          %s350 = int_to_ptr.vmem [resolvable:$true] %s349
          %s351 = sshll.u32 %s347, 4
          %s352 = int_to_ptr.hbm [resolvable:$true] %s351
          %354 = dma.vmem_to_hbm [thread:$0]  %s350, 64, %s352, %s337
        $region48: #{tpu_custom_call.1} parent=39 // pred_fallthru
          _
      $region40: #{tpu_custom_call.1} parent=5 // pred_fallthru
        _
      %p355 = scmp.le.s32.totalorder 2, %s15
      // Predicated region
      $region49: #{tpu_custom_call.1} parent=5 // pred_check
        %p356 = pneg %p355
      $region50: #{tpu_custom_call.1} parent=5 // pred_check_branch
        %358 = sbr.rel (%p356) target = $region52
      $region51: #{tpu_custom_call.1} parent=5 // pred_region
        %s359 = ssub.s32 %s15, 2
        // Predicated region
        $region53: #{tpu_custom_call.1} parent=51 // pred_check
          %p360 = pneg %p154
        $region54: #{tpu_custom_call.1} parent=51 // pred_check_branch
          %362 = sbr.rel (%p360) target = $region56
        $region55: #{tpu_custom_call.1} parent=51 // pred_region
          %s363 = sand.u32 %s139, 1
          %s364 = scalar_lea.sflag [#allocation4], %s363
          %s365 = sand.u32 %s139, 1
          %s366 = smul.addr %s365, 4
          %s367 = scalar_lea.vmem [#allocation5], %s366
          %369 = dma.done %s364, 64
        $region56: #{tpu_custom_call.1} parent=51 // pred_fallthru
          _
      $region52: #{tpu_custom_call.1} parent=5 // pred_fallthru
        _
    $region6: #{tpu_custom_call.1} parent=1 // loop_footer
      %s19 = sadd.s32 1, %s15
    $region7: #{tpu_custom_call.1} parent=1 // loop_footer_branch
      %14 = sbr.rel target = $region3
    $region8: #{tpu_custom_call.1} parent=1 // loop_exit
      _
    %370 = vsyncpa [#allocation3], 1
    %s371 = scalar_lea.sflag [#allocation3], 1
    %372 = vsyncpa %s371, 1
    %373 = vsyncpa [#allocation4], 1
    %s374 = scalar_lea.sflag [#allocation4], 1
    %375 = vsyncpa %s374, 1

</llo_original>
